<compile_context>
chip_gen: v7x
topology: tpu7x:2x2x1
jax: 0.10.0
libtpu: 0.0.40
codegen_flags: <defaults>
</compile_context>

<pallas_src>
import jax
import jax.numpy as jnp
from jax.experimental import pallas as pl
from jax.experimental.pallas import tpu as pltpu

NUM_FEATURES = 5   # `num_features` in the PyTorch script
NUM_CLASSES = 5    # Linear(hidden_channels, 5)
F_PAD = 8          # feature dim padded 5 -> 8 (aligned K for the first matmul)
C_PAD = 128        # class dim padded 5 -> 128 (lane-dense output store)


def gcn_forward_kernel(a_ref, x_ref, w1_ref, b1_ref, w2_ref, b2_ref,
                       wo_ref, bo_ref, out_ref):
    """One grid step = BG graphs: 2x (GCNConv -> ReLU -> Dropout(eval)) -> Linear -> softmax.

    a_ref holds block_diag(A_hat x BG) so each propagation is a single
    [M, M] x [M, H] matmul with M = BG * N (full MXU tile at M = 128).
    """
    a = a_ref[...]                                    # [M, M] bf16 block-diag normalized adjacency

    # ---- GNN block 1: GCNConv(num_features, hidden) -> ReLU -> Dropout(identity) ----
    h = jnp.dot(x_ref[...], w1_ref[...], preferred_element_type=jnp.float32)     # X W1
    h = jnp.dot(a, h.astype(jnp.bfloat16), preferred_element_type=jnp.float32)   # A_hat X W1
    h = jnp.maximum(h + b1_ref[...], 0.0)                                         # + b1, ReLU (f32)

    # ---- GNN block 2: GCNConv(hidden, hidden) -> ReLU -> Dropout(identity) ----
    h = jnp.dot(h.astype(jnp.bfloat16), w2_ref[...], preferred_element_type=jnp.float32)
    h = jnp.dot(a, h.astype(jnp.bfloat16), preferred_element_type=jnp.float32)
    h = jnp.maximum(h + b2_ref[...], 0.0)

    # ---- self.out: Linear(hidden, 5) padded to 128 lanes, then softmax(dim=1) ----
    # Pad columns carry weight 0 and bias -1e30 (kept in f32), so exp() of those
    # lanes is 0 and the 128-lane softmax equals the softmax over the 5 real classes.
    logits = jnp.dot(h.astype(jnp.bfloat16), wo_ref[...],
                     preferred_element_type=jnp.float32) + bo_ref[...]             # [M, 128] f32
    m = jnp.max(logits, axis=-1, keepdims=True)
    e = jnp.exp(logits - m)
    denom = jnp.sum(e, axis=-1, keepdims=True)
    out_ref[...] = e * pl.reciprocal(denom, approx=True)                           # lane-dense store


def _num_grid_splits():
    """2 'parallel' grid steps on v7x (2 TensorCores/chip); 1 on single-TC chips."""
    try:
        kind = jax.devices()[0].device_kind.lower()
        if "v7" in kind:
            return 2
    except Exception:
        pass
    return 1


def gcn_forward(a_hat, x_last, params, *, grid_splits=None):
    """a_hat: [N, N] f32 normalized adjacency shared by all graphs;
    x_last: [B, N, num_features] f32 (i.e. x_in[:, :, -1, :])."""
    w1, b1, w2, b2, wo, bo = params
    B, N, F = x_last.shape
    H = w1.shape[1]

    G = _num_grid_splits() if grid_splits is None else grid_splits
    if B % G != 0:
        G = 1
    BG = B // G          # graphs per grid step
    M = BG * N           # rows per grid step

    # bf16 MXU operands; biases / elementwise / softmax stay f32.
    # Feature dim padded 5 -> 8 with zeros (X columns, W1 rows).
    x_flat = x_last.reshape(B * N, F)
    x_p = jnp.zeros((B * N, F_PAD), jnp.float32).at[:, :F].set(x_flat).astype(jnp.bfloat16)
    w1_p = jnp.zeros((F_PAD, H), jnp.float32).at[:F, :].set(w1).astype(jnp.bfloat16)
    w2_bf = w2.astype(jnp.bfloat16)

    # Shared topology: one block-diagonal A_hat for the BG graphs of a grid step.
    # Passed once with index_map (0, 0) -> VMEM-resident, no per-graph re-DMA and
    # no [B, N, N] broadcast materialized in HBM.
    a_blk = jnp.kron(jnp.eye(BG, dtype=jnp.float32), a_hat).astype(jnp.bfloat16)   # [M, M]

    # Lane-dense output: pad classes 5 -> 128 (weights 0, biases -1e30 in pad cols).
    wo_p = jnp.zeros((H, C_PAD), jnp.float32).at[:, :NUM_CLASSES].set(wo).astype(jnp.bfloat16)
    bo_p = jnp.full((1, C_PAD), -1e30, jnp.float32).at[:, :NUM_CLASSES].set(bo)

    operands = (a_blk, x_p, w1_p, b1, w2_bf, b2, wo_p, bo_p)

    vmem = pltpu.MemorySpace.VMEM
    in_specs = [
        pl.BlockSpec(a_blk.shape, lambda i: (0, 0), memory_space=vmem),   # A block-diag (resident)
        pl.BlockSpec((M, F_PAD), lambda i: (i, 0), memory_space=vmem),    # X rows for this step
        pl.BlockSpec(w1_p.shape, lambda i: (0, 0), memory_space=vmem),
        pl.BlockSpec(b1.shape, lambda i: (0, 0), memory_space=vmem),
        pl.BlockSpec(w2_bf.shape, lambda i: (0, 0), memory_space=vmem),
        pl.BlockSpec(b2.shape, lambda i: (0, 0), memory_space=vmem),
        pl.BlockSpec(wo_p.shape, lambda i: (0, 0), memory_space=vmem),
        pl.BlockSpec(bo_p.shape, lambda i: (0, 0), memory_space=vmem),
    ]
    out_spec = pl.BlockSpec((M, C_PAD), lambda i: (i, 0), memory_space=vmem)

    # Advisory cost hint so XLA can schedule around this small custom call.
    flops = 2 * (B * N * F_PAD * H            # X W1
                 + G * M * M * H * 2          # two block-diag propagations
                 + B * N * H * H              # H W2
                 + B * N * H * C_PAD)         # H Wo
    transcendentals = B * N * (C_PAD + 1)     # exp lanes + reciprocal
    bytes_accessed = sum(int(op.nbytes) for op in operands) + B * N * C_PAD * 4

    out_padded = pl.pallas_call(
        gcn_forward_kernel,
        grid=(G,),
        in_specs=in_specs,
        out_specs=out_spec,
        out_shape=jax.ShapeDtypeStruct((B * N, C_PAD), jnp.float32),
        compiler_params=pltpu.CompilerParams(dimension_semantics=("parallel",)),
        cost_estimate=pl.CostEstimate(flops=int(flops),
                                      transcendentals=int(transcendentals),
                                      bytes_accessed=int(bytes_accessed)),
    )(*operands)

    # Reshape is free (contiguous); the trailing class slice is a tiny XLA copy kept
    # only for API fidelity with the PyTorch module's [.., 5] output.
    return out_padded.reshape(B, N, C_PAD)[:, :, :NUM_CLASSES]


def build_normalized_adjacency(edge_index, num_nodes):
    """Dense A_hat = D^{-1/2} (A + I) D^{-1/2}, matching PyG GCNConv gcn_norm.

    edge_index: [2, E] int32; aggregation is out[target] += norm * x[source],
    so A[target, source] += 1 (scatter-add matches PyG duplicate-edge semantics).
    Built once per graph topology and reused across batch / timesteps.
    """
    src, dst = edge_index[0], edge_index[1]
    a = jnp.zeros((num_nodes, num_nodes), jnp.float32)
    a = a.at[dst, src].add(1.0)
    a = a + jnp.eye(num_nodes, dtype=jnp.float32)            # add self loops
    deg = jnp.sum(a, axis=1)                                  # degree incl. self loop
    dinv = jnp.where(deg > 0, 1.0 / jnp.sqrt(deg), 0.0)
    return a * dinv[:, None] * dinv[None, :]


def init_params(key, hidden_channels):
    """Deterministic synthetic parameters (glorot-uniform weights, small biases)."""
    # TODO(synk): does not reproduce torch.manual_seed(42) PyTorch initialization bit-for-bit.
    k1, k2, k3, k4, k5, k6 = jax.random.split(key, 6)

    def glorot(k, fan_in, fan_out):
        lim = (6.0 / (fan_in + fan_out)) ** 0.5
        return jax.random.uniform(k, (fan_in, fan_out), jnp.float32, -lim, lim)

    w1 = glorot(k1, NUM_FEATURES, hidden_channels)
    b1 = 0.01 * jax.random.normal(k2, (1, hidden_channels), jnp.float32)
    w2 = glorot(k3, hidden_channels, hidden_channels)
    b2 = 0.01 * jax.random.normal(k4, (1, hidden_channels), jnp.float32)
    wo = glorot(k5, hidden_channels, NUM_CLASSES)
    bo = 0.01 * jax.random.normal(k6, (1, NUM_CLASSES), jnp.float32)
    return (w1, b1, w2, b2, wo, bo)


if __name__ == "__main__":
    key = jax.random.PRNGKey(0)
    kx, kp = jax.random.split(key)

    B, N, T, HIDDEN = 8, 16, 8, 32   # 8 graphs, 16 nodes, 8 timesteps, hidden_channels=32

    # Node features x_in: [B, N, T, num_features]; forward uses x_in[:, :, -1, :].
    x_in = jax.random.normal(kx, (B, N, T, NUM_FEATURES), jnp.float32)

    # Deterministic ring graph (bidirectional edges), edge_index: [2, 2N].
    idx = jnp.arange(N, dtype=jnp.int32)
    src = jnp.concatenate([idx, (idx + 1) % N])
    dst = jnp.concatenate([(idx + 1) % N, idx])
    edge_index = jnp.stack([src, dst])

    # A_hat built once for the shared topology; NOT broadcast per graph.
    a_hat = build_normalized_adjacency(edge_index, N)        # [N, N]

    params = init_params(kp, HIDDEN)

    x_last = x_in[:, :, -1, :]                       # [B, N, num_features]
    out = gcn_forward(a_hat, x_last, params)         # [B, N, 5], rows sum to 1
    out = jax.block_until_ready(out)

    assert out.shape == (B, N, NUM_CLASSES)
    assert bool(jnp.all(jnp.isfinite(out)))
    assert bool(jnp.all(out >= 0.0))
    assert bool(jnp.allclose(jnp.sum(out, axis=-1), 1.0, atol=5e-3))
    print("KERNEL_OK")
</pallas_src>

<mosaic_0001>
module attributes {stable_mosaic.version = 11 : i64} {
  func.func @gcn_forward_kernel(%arg0: i32, %arg1: memref<128x128xbf16, #tpu.memory_space<vmem>>, %arg2: memref<128x8xbf16, #tpu.memory_space<vmem>>, %arg3: memref<8x32xbf16, #tpu.memory_space<vmem>>, %arg4: memref<1x32xf32, #tpu.memory_space<vmem>>, %arg5: memref<32x32xbf16, #tpu.memory_space<vmem>>, %arg6: memref<1x32xf32, #tpu.memory_space<vmem>>, %arg7: memref<32x128xbf16, #tpu.memory_space<vmem>>, %arg8: memref<1x128xf32, #tpu.memory_space<vmem>>, %arg9: memref<128x128xf32, #tpu.memory_space<vmem>>) attributes {dimension_semantics = [#tpu.dimension_semantics<parallel>], iteration_bounds = array<i64: 1>, scalar_prefetch = 0 : i64, scratch_operands = 0 : i64, tpu.core_type = #tpu.core_type<tc>, window_params = [{pipeline_mode = #tpu.pipeline_mode<synchronous>, transform_indices = @transform_0, window_bounds = array<i64: 128, 128>}, {transform_indices = @transform_1, window_bounds = array<i64: 128, 8>}, {pipeline_mode = #tpu.pipeline_mode<synchronous>, transform_indices = @transform_2, window_bounds = array<i64: 8, 32>}, {pipeline_mode = #tpu.pipeline_mode<synchronous>, transform_indices = @transform_3, window_bounds = array<i64: 1, 32>}, {pipeline_mode = #tpu.pipeline_mode<synchronous>, transform_indices = @transform_4, window_bounds = array<i64: 32, 32>}, {pipeline_mode = #tpu.pipeline_mode<synchronous>, transform_indices = @transform_5, window_bounds = array<i64: 1, 32>}, {pipeline_mode = #tpu.pipeline_mode<synchronous>, transform_indices = @transform_6, window_bounds = array<i64: 32, 128>}, {pipeline_mode = #tpu.pipeline_mode<synchronous>, transform_indices = @transform_7, window_bounds = array<i64: 1, 128>}, {transform_indices = @transform_8, window_bounds = array<i64: 128, 128>}]} {
    %c0 = arith.constant 0 : index
    %c0_0 = arith.constant 0 : index
    %0 = vector.load %arg1[%c0, %c0_0] : memref<128x128xbf16, #tpu.memory_space<vmem>>, vector<128x128xbf16>
    %c0_1 = arith.constant 0 : index
    %c0_2 = arith.constant 0 : index
    %1 = vector.load %arg2[%c0_1, %c0_2] : memref<128x8xbf16, #tpu.memory_space<vmem>>, vector<128x8xbf16>
    %c0_3 = arith.constant 0 : index
    %c0_4 = arith.constant 0 : index
    %2 = vector.load %arg3[%c0_3, %c0_4] : memref<8x32xbf16, #tpu.memory_space<vmem>>, vector<8x32xbf16>
    %cst = arith.constant dense<0.000000e+00> : vector<128x32xf32>
    %3 = tpu.matmul %1, %2, %cst {dimension_numbers = #tpu.dot_dimension_numbers<[1], [0], [0], [1], [0, 0, 1, 1], [], []>} : vector<128x8xbf16>, vector<8x32xbf16>, vector<128x32xf32> -> vector<128x32xf32>
    %4 = arith.truncf %3 : vector<128x32xf32> to vector<128x32xbf16>
    %cst_5 = arith.constant dense<0.000000e+00> : vector<128x32xf32>
    %5 = tpu.matmul %0, %4, %cst_5 {dimension_numbers = #tpu.dot_dimension_numbers<[1], [0], [0], [1], [0, 0, 1, 1], [], []>} : vector<128x128xbf16>, vector<128x32xbf16>, vector<128x32xf32> -> vector<128x32xf32>
    %c0_6 = arith.constant 0 : index
    %c0_7 = arith.constant 0 : index
    %6 = vector.load %arg4[%c0_6, %c0_7] : memref<1x32xf32, #tpu.memory_space<vmem>>, vector<1x32xf32>
    %7 = vector.broadcast %6 : vector<1x32xf32> to vector<128x32xf32>
    %8 = arith.addf %5, %7 : vector<128x32xf32>
    %cst_8 = arith.constant 0.000000e+00 : f32
    %9 = vector.broadcast %cst_8 : f32 to vector<128x32xf32>
    %10 = arith.maximumf %8, %9 : vector<128x32xf32>
    %11 = arith.truncf %10 : vector<128x32xf32> to vector<128x32xbf16>
    %c0_9 = arith.constant 0 : index
    %c0_10 = arith.constant 0 : index
    %12 = vector.load %arg5[%c0_9, %c0_10] : memref<32x32xbf16, #tpu.memory_space<vmem>>, vector<32x32xbf16>
    %cst_11 = arith.constant dense<0.000000e+00> : vector<128x32xf32>
    %13 = tpu.matmul %11, %12, %cst_11 {dimension_numbers = #tpu.dot_dimension_numbers<[1], [0], [0], [1], [0, 0, 1, 1], [], []>} : vector<128x32xbf16>, vector<32x32xbf16>, vector<128x32xf32> -> vector<128x32xf32>
    %14 = arith.truncf %13 : vector<128x32xf32> to vector<128x32xbf16>
    %cst_12 = arith.constant dense<0.000000e+00> : vector<128x32xf32>
    %15 = tpu.matmul %0, %14, %cst_12 {dimension_numbers = #tpu.dot_dimension_numbers<[1], [0], [0], [1], [0, 0, 1, 1], [], []>} : vector<128x128xbf16>, vector<128x32xbf16>, vector<128x32xf32> -> vector<128x32xf32>
    %c0_13 = arith.constant 0 : index
    %c0_14 = arith.constant 0 : index
    %16 = vector.load %arg6[%c0_13, %c0_14] : memref<1x32xf32, #tpu.memory_space<vmem>>, vector<1x32xf32>
    %17 = vector.broadcast %16 : vector<1x32xf32> to vector<128x32xf32>
    %18 = arith.addf %15, %17 : vector<128x32xf32>
    %cst_15 = arith.constant 0.000000e+00 : f32
    %19 = vector.broadcast %cst_15 : f32 to vector<128x32xf32>
    %20 = arith.maximumf %18, %19 : vector<128x32xf32>
    %21 = arith.truncf %20 : vector<128x32xf32> to vector<128x32xbf16>
    %c0_16 = arith.constant 0 : index
    %c0_17 = arith.constant 0 : index
    %22 = vector.load %arg7[%c0_16, %c0_17] : memref<32x128xbf16, #tpu.memory_space<vmem>>, vector<32x128xbf16>
    %cst_18 = arith.constant dense<0.000000e+00> : vector<128x128xf32>
    %23 = tpu.matmul %21, %22, %cst_18 {dimension_numbers = #tpu.dot_dimension_numbers<[1], [0], [0], [1], [0, 0, 1, 1], [], []>} : vector<128x32xbf16>, vector<32x128xbf16>, vector<128x128xf32> -> vector<128x128xf32>
    %c0_19 = arith.constant 0 : index
    %c0_20 = arith.constant 0 : index
    %24 = vector.load %arg8[%c0_19, %c0_20] : memref<1x128xf32, #tpu.memory_space<vmem>>, vector<1x128xf32>
    %25 = vector.broadcast %24 : vector<1x128xf32> to vector<128x128xf32>
    %26 = arith.addf %23, %25 : vector<128x128xf32>
    %cst_21 = arith.constant dense<0xFF800000> : vector<128xf32>
    %27 = vector.multi_reduction <maximumf>, %26, %cst_21 [1] : vector<128x128xf32> to vector<128xf32>
    %28 = vector.shape_cast %27 : vector<128xf32> to vector<128x1xf32>
    %29 = vector.broadcast %28 : vector<128x1xf32> to vector<128x128xf32>
    %30 = arith.subf %26, %29 : vector<128x128xf32>
    %31 = math.exp %30 : vector<128x128xf32>
    %cst_22 = arith.constant dense<0.000000e+00> : vector<128xf32>
    %32 = vector.multi_reduction <add>, %31, %cst_22 [1] : vector<128x128xf32> to vector<128xf32>
    %33 = vector.shape_cast %32 : vector<128xf32> to vector<128x1xf32>
    %34 = tpu.reciprocal %33 {approx = true} : vector<128x1xf32> -> vector<128x1xf32>
    %35 = vector.broadcast %34 : vector<128x1xf32> to vector<128x128xf32>
    %36 = arith.mulf %31, %35 : vector<128x128xf32>
    %c0_23 = arith.constant 0 : index
    %c0_24 = arith.constant 0 : index
    %37 = vector.load %arg9[%c0_23, %c0_24] : memref<128x128xf32, #tpu.memory_space<vmem>>, vector<128x128xf32>
    tpu.vector_store %arg9[%c0_23, %c0_24], %36 {strides = array<i32>} : memref<128x128xf32, #tpu.memory_space<vmem>>, vector<128x128xf32>,
    return
  }
  func.func @transform_0(%arg0: i32) -> (i32, i32) {
    %c0_i32 = arith.constant 0 : i32
    %c0_i32_0 = arith.constant 0 : i32
    %c0_i32_1 = arith.constant 0 : i32
    return %c0_i32, %c0_i32_0 : i32, i32
  }
  func.func @transform_1(%arg0: i32) -> (i32, i32) {
    %c0_i32 = arith.constant 0 : i32
    %c0_i32_0 = arith.constant 0 : i32
    return %arg0, %c0_i32 : i32, i32
  }
  func.func @transform_2(%arg0: i32) -> (i32, i32) {
    %c0_i32 = arith.constant 0 : i32
    %c0_i32_0 = arith.constant 0 : i32
    %c0_i32_1 = arith.constant 0 : i32
    return %c0_i32, %c0_i32_0 : i32, i32
  }
  func.func @transform_3(%arg0: i32) -> (i32, i32) {
    %c0_i32 = arith.constant 0 : i32
    %c0_i32_0 = arith.constant 0 : i32
    %c0_i32_1 = arith.constant 0 : i32
    return %c0_i32, %c0_i32_0 : i32, i32
  }
  func.func @transform_4(%arg0: i32) -> (i32, i32) {
    %c0_i32 = arith.constant 0 : i32
    %c0_i32_0 = arith.constant 0 : i32
    %c0_i32_1 = arith.constant 0 : i32
    return %c0_i32, %c0_i32_0 : i32, i32
  }
  func.func @transform_5(%arg0: i32) -> (i32, i32) {
    %c0_i32 = arith.constant 0 : i32
    %c0_i32_0 = arith.constant 0 : i32
    %c0_i32_1 = arith.constant 0 : i32
    return %c0_i32, %c0_i32_0 : i32, i32
  }
  func.func @transform_6(%arg0: i32) -> (i32, i32) {
    %c0_i32 = arith.constant 0 : i32
    %c0_i32_0 = arith.constant 0 : i32
    %c0_i32_1 = arith.constant 0 : i32
    return %c0_i32, %c0_i32_0 : i32, i32
  }
  func.func @transform_7(%arg0: i32) -> (i32, i32) {
    %c0_i32 = arith.constant 0 : i32
    %c0_i32_0 = arith.constant 0 : i32
    %c0_i32_1 = arith.constant 0 : i32
    return %c0_i32, %c0_i32_0 : i32, i32
  }
  func.func @transform_8(%arg0: i32) -> (i32, i32) {
    %c0_i32 = arith.constant 0 : i32
    %c0_i32_0 = arith.constant 0 : i32
    return %arg0, %c0_i32 : i32, i32
  }
}

</mosaic_0001>

<llo_original>
// kernel: tpu_custom_call.1
$region0: #{tpu_custom_call.1}
  #allocation0 [shape = 'u32[]', space=smem, size = 0x4, offset = 0x4, fixed_abs, tag = 'smem constant byte address 0x4 - core index']
  #allocation1 [shape = 'u32[144,128]{1,0:T(1,128)}', space=vmem, size = 0x12000, scoped, tag = 'internal scratch']
  %s0 = inlined_call_operand.vmem [shape: bf16[128,128], index: 0, kind: input, shape index: {}]
  %s1 = inlined_call_operand.vmem [shape: bf16[128,8], index: 1, kind: input, shape index: {}]
  %s2 = inlined_call_operand.hbm [shape: bf16[8,32], index: 2, kind: input, shape index: {}]
  %s3 = inlined_call_operand.vmem [shape: f32[1,32], index: 3, kind: input, shape index: {}]
  %s4 = inlined_call_operand.vmem [shape: bf16[32,32], index: 4, kind: input, shape index: {}]
  %s5 = inlined_call_operand.vmem [shape: f32[1,32], index: 5, kind: input, shape index: {}]
  %s6 = inlined_call_operand.hbm [shape: bf16[32,128], index: 6, kind: input, shape index: {}]
  %s7 = inlined_call_operand.vmem [shape: f32[1,128], index: 7, kind: input, shape index: {}]
  %s8 = inlined_call_operand.hbm [shape: f32[128,128], index: 8, kind: output, shape index: {}]
  %s9 = sld [smem:[#allocation0]]
  $region50: #{tpu_custom_call.1} parent=0
    _
  %s11 = ssub.s32 1, %s9
  %s12 = scalar_select 0, %s11, %s9
  $region1: #{tpu_custom_call.1} parent=0
    #allocation2 [shape = 'u8[2048]{0}', space=vmem, size = 0x800, scoped, tag = 'input window, operand 2, single buffered']
    #allocation3 [shape = 's32[1]{0}', space=sflag, size = 0x4, scoped, tag = 'scoped memory for tpu_custom_call.1']
    #allocation4 [shape = 's32[1]{0}', space=sflag, size = 0x4, scoped, tag = 'scoped memory for tpu_custom_call.1']
    #allocation5 [shape = 'u8[8192]{0}', space=vmem, size = 0x2000, scoped, tag = 'input window, operand 6, single buffered']
    #allocation6 [shape = 's32[1]{0}', space=sflag, size = 0x4, scoped, tag = 'scoped memory for tpu_custom_call.1']
    #allocation7 [shape = 'u8[65536]{0}', space=vmem, size = 0x10000, scoped, tag = 'output window, operand 0, single buffered']
    %13 = vsyncpa [#allocation3], 0
    %14 = vsyncpa [#allocation6], 0
    %15 = vsyncpa [#allocation4], 0
    // Predicated region
    $region2: #{tpu_custom_call.1} parent=1 // pred_check
      _
    $region3: #{tpu_custom_call.1} parent=1 // pred_check_branch
      %17 = sbr.rel (0) target = $region5
    $region4: #{tpu_custom_call.1} parent=1 // pred_region
      _
    $region5: #{tpu_custom_call.1} parent=1 // pred_fallthru
      _
    // Predicated region
    $region6: #{tpu_custom_call.1} parent=1 // pred_check
      _
    $region7: #{tpu_custom_call.1} parent=1 // pred_check_branch
      %19 = sbr.rel (0) target = $region9
    $region8: #{tpu_custom_call.1} parent=1 // pred_region
      _
    $region9: #{tpu_custom_call.1} parent=1 // pred_fallthru
      _
    // Predicated region
    $region10: #{tpu_custom_call.1} parent=1 // pred_check
      _
    $region11: #{tpu_custom_call.1} parent=1 // pred_check_branch
      %21 = sbr.rel (0) target = $region13
    $region12: #{tpu_custom_call.1} parent=1 // pred_region
      %s23 = ssub.s32 64, 64
      %24 = vsyncadd [#allocation3], %s23
      %s26 = sshll.u32 [#allocation2], 4
      %s27 = int_to_ptr.vmem [resolvable:$true] %s26
      %29 = dma.hbm_to_vmem [thread:$0]  %s2, 64, %s27, [#allocation3]
    $region13: #{tpu_custom_call.1} parent=1 // pred_fallthru
      _
    // Predicated region
    $region14: #{tpu_custom_call.1} parent=1 // pred_check
      _
    $region15: #{tpu_custom_call.1} parent=1 // pred_check_branch
      %31 = sbr.rel (0) target = $region17
    $region16: #{tpu_custom_call.1} parent=1 // pred_region
      _
    $region17: #{tpu_custom_call.1} parent=1 // pred_fallthru
      _
    // Predicated region
    $region18: #{tpu_custom_call.1} parent=1 // pred_check
      _
    $region19: #{tpu_custom_call.1} parent=1 // pred_check_branch
      %33 = sbr.rel (0) target = $region21
    $region20: #{tpu_custom_call.1} parent=1 // pred_region
      _
    $region21: #{tpu_custom_call.1} parent=1 // pred_fallthru
      _
    // Predicated region
    $region22: #{tpu_custom_call.1} parent=1 // pred_check
      _
    $region23: #{tpu_custom_call.1} parent=1 // pred_check_branch
      %35 = sbr.rel (0) target = $region25
    $region24: #{tpu_custom_call.1} parent=1 // pred_region
      _
    $region25: #{tpu_custom_call.1} parent=1 // pred_fallthru
      _
    // Predicated region
    $region26: #{tpu_custom_call.1} parent=1 // pred_check
      _
    $region27: #{tpu_custom_call.1} parent=1 // pred_check_branch
      %37 = sbr.rel (0) target = $region29
    $region28: #{tpu_custom_call.1} parent=1 // pred_region
      %s39 = ssub.s32 256, 256
      %40 = vsyncadd [#allocation6], %s39
      %s41 = sshll.u32 [#allocation5], 4
      %s42 = int_to_ptr.vmem [resolvable:$true] %s41
      %47 = dma.hbm_to_vmem [thread:$0]  %s6, 256, %s42, [#allocation6], 64, 64, 4
    $region29: #{tpu_custom_call.1} parent=1 // pred_fallthru
      _
    // Predicated region
    $region30: #{tpu_custom_call.1} parent=1 // pred_check
      _
    $region31: #{tpu_custom_call.1} parent=1 // pred_check_branch
      %49 = sbr.rel (0) target = $region33
    $region32: #{tpu_custom_call.1} parent=1 // pred_region
      _
    $region33: #{tpu_custom_call.1} parent=1 // pred_fallthru
      _
    // Predicated region
    $region34: #{tpu_custom_call.1} parent=1 // pred_check
      _
    $region35: #{tpu_custom_call.1} parent=1 // pred_check_branch
      %51 = sbr.rel (0) target = $region37
    $region36: #{tpu_custom_call.1} parent=1 // pred_region
      %52 = dma.done [#allocation3], 64
    $region37: #{tpu_custom_call.1} parent=1 // pred_fallthru
      _
    // Predicated region
    $region38: #{tpu_custom_call.1} parent=1 // pred_check
      _
    $region39: #{tpu_custom_call.1} parent=1 // pred_check_branch
      %54 = sbr.rel (0) target = $region41
    $region40: #{tpu_custom_call.1} parent=1 // pred_region
      %55 = dma.done [#allocation6], 256
    $region41: #{tpu_custom_call.1} parent=1 // pred_fallthru
      _
    %v57 = vld [vmem:[%s0] sm:$0xf]
    %v58 = vld [vmem:[%s0 + $0x4] sm:$0xf]
    %v59 = vld [vmem:[%s0 + $0x8] sm:$0xf]
    %v60 = vld [vmem:[%s0 + $0xc] sm:$0xf]
    %v61 = vld [vmem:[%s0 + $0x10] sm:$0xf]
    %v62 = vld [vmem:[%s0 + $0x14] sm:$0xf]
    %v63 = vld [vmem:[%s0 + $0x18] sm:$0xf]
    %v64 = vld [vmem:[%s0 + $0x1c] sm:$0xf]
    %v65 = vld [vmem:[%s0 + $0x20] sm:$0xf]
    %v66 = vld [vmem:[%s0 + $0x24] sm:$0xf]
    %v67 = vld [vmem:[%s0 + $0x28] sm:$0xf]
    %v68 = vld [vmem:[%s0 + $0x2c] sm:$0xf]
    %v69 = vld [vmem:[%s0 + $0x30] sm:$0xf]
    %v70 = vld [vmem:[%s0 + $0x34] sm:$0xf]
    %v71 = vld [vmem:[%s0 + $0x38] sm:$0xf]
    %v72 = vld [vmem:[%s0 + $0x3c] sm:$0xf]
    %v73 = vld [vmem:[%s1] sm:$0xf]
    %v74 = vld [vmem:[%s1 + $0x4] sm:$0xf]
    %v75 = vld [vmem:[%s1 + $0x8] sm:$0xf]
    %v76 = vld [vmem:[%s1 + $0xc] sm:$0xf]
    %v77 = vld [vmem:[%s1 + $0x10] sm:$0xf]
    %v78 = vld [vmem:[%s1 + $0x14] sm:$0xf]
    %v79 = vld [vmem:[%s1 + $0x18] sm:$0xf]
    %v80 = vld [vmem:[%s1 + $0x1c] sm:$0xf]
    %v81 = vld [vmem:[%s1 + $0x20] sm:$0xf]
    %v82 = vld [vmem:[%s1 + $0x24] sm:$0xf]
    %v83 = vld [vmem:[%s1 + $0x28] sm:$0xf]
    %v84 = vld [vmem:[%s1 + $0x2c] sm:$0xf]
    %v85 = vld [vmem:[%s1 + $0x30] sm:$0xf]
    %v86 = vld [vmem:[%s1 + $0x34] sm:$0xf]
    %v87 = vld [vmem:[%s1 + $0x38] sm:$0xf]
    %v88 = vld [vmem:[%s1 + $0x3c] sm:$0xf]
    %v89 = vld [vmem:[#allocation2] sm:$0xf]
    %v106 = vunpack.c.l.b16 %v73
    %v107 = vunpack.c.l.b16 %v74
    %v108 = vunpack.c.l.b16 %v75
    %v109 = vunpack.c.l.b16 %v76
    %v110 = vunpack.c.l.b16 %v77
    %v111 = vunpack.c.l.b16 %v78
    %v112 = vunpack.c.l.b16 %v79
    %v113 = vunpack.c.l.b16 %v80
    %v114 = vunpack.c.l.b16 %v81
    %v115 = vunpack.c.l.b16 %v82
    %v116 = vunpack.c.l.b16 %v83
    %v117 = vunpack.c.l.b16 %v84
    %v118 = vunpack.c.l.b16 %v85
    %v119 = vunpack.c.l.b16 %v86
    %v120 = vunpack.c.l.b16 %v87
    %v121 = vunpack.c.l.b16 %v88
    %v122 = vpack.c.b16 %v107, %v106
    %v123 = vpack.c.b16 %v109, %v108
    %v124 = vpack.c.b16 %v111, %v110
    %v125 = vpack.c.b16 %v113, %v112
    %v126 = vpack.c.b16 %v115, %v114
    %v127 = vpack.c.b16 %v117, %v116
    %v128 = vpack.c.b16 %v119, %v118
    %v129 = vpack.c.b16 %v121, %v120
    %vm130 = vcmask 64512
    %v132 = vsel %vm130, %v122, 0
    %v135 = vsel %vm130, %v123, 0
    %v138 = vsel %vm130, %v124, 0
    %v141 = vsel %vm130, %v125, 0
    %v144 = vsel %vm130, %v126, 0
    %v147 = vsel %vm130, %v127, 0
    %v150 = vsel %vm130, %v128, 0
    %v153 = vsel %vm130, %v129, 0
    %vm155 = vcmask 1043456
    %v157 = vsel %vm155, %v89, 0
    %159 = vmatprep.subr.bf16.mxu0 0
    %160 = vmatpush1.bf16.msra.mxu0 %v157
    %161 = vmatprep.subr.bf16.mxu0 0
    %162 = vmatpush1.bf16.msra.mxu0 0
    %163 = vmatprep.subr.bf16.mxu0 0
    %164 = vmatpush1.bf16.msra.mxu0 0
    %165 = vmatprep.subr.bf16.mxu0 0
    %166 = vmatpush1.bf16.msra.mxu0 0
    %167 = vmatprep.subr.bf16.mxu0 0
    %168 = vmatpush1.bf16.msra.mxu0 0
    %169 = vmatprep.subr.bf16.mxu0 0
    %170 = vmatpush1.bf16.msra.mxu0 0
    %171 = vmatprep.subr.bf16.mxu0 0
    %172 = vmatpush1.bf16.msra.mxu0 0
    %173 = vmatprep.subr.bf16.mxu0 0
    %174 = vmatpush1.bf16.msra.mxu0 0
    %175 = vmatprep.subr.bf16.mxu0 0
    %176 = vmatpush1.bf16.msra.mxu0 0
    %177 = vmatprep.subr.bf16.mxu0 0
    %178 = vmatpush1.bf16.msra.mxu0 0
    %179 = vmatprep.subr.bf16.mxu0 0
    %180 = vmatpush1.bf16.msra.mxu0 0
    %181 = vmatprep.subr.bf16.mxu0 0
    %182 = vmatpush1.bf16.msra.mxu0 0
    %183 = vmatprep.subr.bf16.mxu0 0
    %184 = vmatpush1.bf16.msra.mxu0 0
    %185 = vmatprep.subr.bf16.mxu0 0
    %186 = vmatpush1.bf16.msra.mxu0 0
    %187 = vmatprep.subr.bf16.mxu0 0
    %188 = vmatpush1.bf16.msra.mxu0 0
    %189 = vmatprep.subr.bf16.mxu0 0
    %190 = vmatpush1.bf16.msra.mxu0 0
    %191 = vmatprep.mubr.bf16.mxu0 0
    %192 = vmatmul.mubr.bf16.gmra.mrb[0].mxu0 %v132
    %v193 = vpop.f32.mrb[0].mxu0
    %v194 = vadd.f32 0.0, %v193
    %v195 = vpop.f32.mrb[0].mxu0
    %v196 = vpop.f32.mrb[0].mxu0
    %v197 = vadd.f32 0.0, %v196
    %v198 = vpop.f32.mrb[0].mxu0
    %199 = vmatprep.mubr.bf16.mxu0 0
    %200 = vmatmul.mubr.bf16.gmra.mrb[0].mxu0 %v135
    %v201 = vpop.f32.mrb[0].mxu0
    %v202 = vadd.f32 0.0, %v201
    %v203 = vpop.f32.mrb[0].mxu0
    %v204 = vpop.f32.mrb[0].mxu0
    %v205 = vadd.f32 0.0, %v204
    %v206 = vpop.f32.mrb[0].mxu0
    %207 = vmatprep.mubr.bf16.mxu0 0
    %208 = vmatmul.mubr.bf16.gmra.mrb[0].mxu0 %v138
    %v209 = vpop.f32.mrb[0].mxu0
    %v210 = vadd.f32 0.0, %v209
    %v211 = vpop.f32.mrb[0].mxu0
    %v212 = vpop.f32.mrb[0].mxu0
    %v213 = vadd.f32 0.0, %v212
    %v214 = vpop.f32.mrb[0].mxu0
    %215 = vmatprep.mubr.bf16.mxu0 0
    %216 = vmatmul.mubr.bf16.gmra.mrb[0].mxu0 %v141
    %v217 = vpop.f32.mrb[0].mxu0
    %v218 = vadd.f32 0.0, %v217
    %v219 = vpop.f32.mrb[0].mxu0
    %v220 = vpop.f32.mrb[0].mxu0
    %v221 = vadd.f32 0.0, %v220
    %v222 = vpop.f32.mrb[0].mxu0
    %223 = vmatprep.mubr.bf16.mxu0 0
    %224 = vmatmul.mubr.bf16.gmra.mrb[0].mxu0 %v144
    %v225 = vpop.f32.mrb[0].mxu0
    %v226 = vadd.f32 0.0, %v225
    %v227 = vpop.f32.mrb[0].mxu0
    %v228 = vpop.f32.mrb[0].mxu0
    %v229 = vadd.f32 0.0, %v228
    %v230 = vpop.f32.mrb[0].mxu0
    %231 = vmatprep.mubr.bf16.mxu0 0
    %232 = vmatmul.mubr.bf16.gmra.mrb[0].mxu0 %v147
    %v233 = vpop.f32.mrb[0].mxu0
    %v234 = vadd.f32 0.0, %v233
    %v235 = vpop.f32.mrb[0].mxu0
    %v236 = vpop.f32.mrb[0].mxu0
    %v237 = vadd.f32 0.0, %v236
    %v238 = vpop.f32.mrb[0].mxu0
    %239 = vmatprep.mubr.bf16.mxu0 0
    %240 = vmatmul.mubr.bf16.gmra.mrb[0].mxu0 %v150
    %v241 = vpop.f32.mrb[0].mxu0
    %v242 = vadd.f32 0.0, %v241
    %v243 = vpop.f32.mrb[0].mxu0
    %v244 = vpop.f32.mrb[0].mxu0
    %v245 = vadd.f32 0.0, %v244
    %v246 = vpop.f32.mrb[0].mxu0
    %247 = vmatprep.mubr.bf16.mxu0 0
    %248 = vmatmul.mubr.bf16.gmra.mrb[0].mxu0 %v153
    %v249 = vpop.f32.mrb[0].mxu0
    %v250 = vadd.f32 0.0, %v249
    %v251 = vpop.f32.mrb[0].mxu0
    %v252 = vpop.f32.mrb[0].mxu0
    %v253 = vadd.f32 0.0, %v252
    %v254 = vpop.f32.mrb[0].mxu0
    %255 = vdwg.mxu0
    %v256 = vpack.c.bf16 %v197, %v194
    %v257 = vpack.c.bf16 %v205, %v202
    %v258 = vpack.c.bf16 %v213, %v210
    %v259 = vpack.c.bf16 %v221, %v218
    %v260 = vpack.c.bf16 %v229, %v226
    %v261 = vpack.c.bf16 %v237, %v234
    %v262 = vpack.c.bf16 %v245, %v242
    %v263 = vpack.c.bf16 %v253, %v250
    %v264 = vld [vmem:[%s3] sm:$0x1]
    %v266 = vlaneseq
    %v267 = vshrl.u32 %v266, 7
    %v268 = vsub.s32 0, %v267
    %v269 = vrot.slane %v264, %v268
    %v287 = vunpack.c.l.b16 %v57
    %v288 = vunpack.c.l.b16 %v58
    %v289 = vunpack.c.l.b16 %v59
    %v290 = vunpack.c.l.b16 %v60
    %v291 = vunpack.c.l.b16 %v61
    %v292 = vunpack.c.l.b16 %v62
    %v293 = vunpack.c.l.b16 %v63
    %v294 = vunpack.c.l.b16 %v64
    %v295 = vunpack.c.l.b16 %v65
    %v296 = vunpack.c.l.b16 %v66
    %v297 = vunpack.c.l.b16 %v67
    %v298 = vunpack.c.l.b16 %v68
    %v299 = vunpack.c.l.b16 %v69
    %v300 = vunpack.c.l.b16 %v70
    %v301 = vunpack.c.l.b16 %v71
    %v302 = vunpack.c.l.b16 %v72
    %v303 = vpack.c.b16 %v288, %v287
    %v304 = vpack.c.b16 %v290, %v289
    %v305 = vpack.c.b16 %v292, %v291
    %v306 = vpack.c.b16 %v294, %v293
    %v307 = vpack.c.b16 %v296, %v295
    %v308 = vpack.c.b16 %v298, %v297
    %v309 = vpack.c.b16 %v300, %v299
    %v310 = vpack.c.b16 %v302, %v301
    %319 = vmatprep.subr.bf16.mxu0 0
    %320 = vmatpush1.bf16.msra.mxu0 %v256
    %321 = vmatprep.subr.bf16.mxu0 0
    %322 = vmatpush1.bf16.msra.mxu0 %v257
    %323 = vmatprep.subr.bf16.mxu0 0
    %324 = vmatpush1.bf16.msra.mxu0 %v258
    %325 = vmatprep.subr.bf16.mxu0 0
    %326 = vmatpush1.bf16.msra.mxu0 %v259
    %327 = vmatprep.subr.bf16.mxu0 0
    %328 = vmatpush1.bf16.msra.mxu0 %v260
    %329 = vmatprep.subr.bf16.mxu0 0
    %330 = vmatpush1.bf16.msra.mxu0 %v261
    %331 = vmatprep.subr.bf16.mxu0 0
    %332 = vmatpush1.bf16.msra.mxu0 %v262
    %333 = vmatprep.subr.bf16.mxu0 0
    %334 = vmatpush1.bf16.msra.mxu0 %v263
    %335 = vmatprep.subr.bf16.mxu0 0
    %336 = vmatpush1.bf16.msra.mxu0 0
    %337 = vmatprep.subr.bf16.mxu0 0
    %338 = vmatpush1.bf16.msra.mxu0 0
    %339 = vmatprep.subr.bf16.mxu0 0
    %340 = vmatpush1.bf16.msra.mxu0 0
    %341 = vmatprep.subr.bf16.mxu0 0
    %342 = vmatpush1.bf16.msra.mxu0 0
    %343 = vmatprep.subr.bf16.mxu0 0
    %344 = vmatpush1.bf16.msra.mxu0 0
    %345 = vmatprep.subr.bf16.mxu0 0
    %346 = vmatpush1.bf16.msra.mxu0 0
    %347 = vmatprep.subr.bf16.mxu0 0
    %348 = vmatpush1.bf16.msra.mxu0 0
    %349 = vmatprep.subr.bf16.mxu0 0
    %350 = vmatpush1.bf16.msra.mxu0 0
    %351 = vmatprep.mubr.bf16.mxu0 0
    %352 = vmatmul.mubr.bf16.gmra.mrb[0].mxu0 %v303
    %v353 = vpop.f32.mrb[0].mxu0
    %v354 = vadd.f32 %v269, %v353
    %v355 = vpop.f32.mrb[0].mxu0
    %v356 = vpop.f32.mrb[0].mxu0
    %v357 = vadd.f32 %v269, %v356
    %v358 = vpop.f32.mrb[0].mxu0
    %359 = vmatprep.mubr.bf16.mxu0 0
    %360 = vmatmul.mubr.bf16.gmra.mrb[0].mxu0 %v304
    %v361 = vpop.f32.mrb[0].mxu0
    %v362 = vadd.f32 %v269, %v361
    %v363 = vpop.f32.mrb[0].mxu0
    %v364 = vpop.f32.mrb[0].mxu0
    %v365 = vadd.f32 %v269, %v364
    %v366 = vpop.f32.mrb[0].mxu0
    %367 = vmatprep.mubr.bf16.mxu0 0
    %368 = vmatmul.mubr.bf16.gmra.mrb[0].mxu0 %v305
    %v369 = vpop.f32.mrb[0].mxu0
    %v370 = vadd.f32 %v269, %v369
    %v371 = vpop.f32.mrb[0].mxu0
    %v372 = vpop.f32.mrb[0].mxu0
    %v373 = vadd.f32 %v269, %v372
    %v374 = vpop.f32.mrb[0].mxu0
    %375 = vmatprep.mubr.bf16.mxu0 0
    %376 = vmatmul.mubr.bf16.gmra.mrb[0].mxu0 %v306
    %v377 = vpop.f32.mrb[0].mxu0
    %v378 = vadd.f32 %v269, %v377
    %v379 = vpop.f32.mrb[0].mxu0
    %v380 = vpop.f32.mrb[0].mxu0
    %v381 = vadd.f32 %v269, %v380
    %v382 = vpop.f32.mrb[0].mxu0
    %383 = vmatprep.mubr.bf16.mxu0 0
    %384 = vmatmul.mubr.bf16.gmra.mrb[0].mxu0 %v307
    %v385 = vpop.f32.mrb[0].mxu0
    %v386 = vadd.f32 %v269, %v385
    %v387 = vpop.f32.mrb[0].mxu0
    %v388 = vpop.f32.mrb[0].mxu0
    %v389 = vadd.f32 %v269, %v388
    %v390 = vpop.f32.mrb[0].mxu0
    %391 = vmatprep.mubr.bf16.mxu0 0
    %392 = vmatmul.mubr.bf16.gmra.mrb[0].mxu0 %v308
    %v393 = vpop.f32.mrb[0].mxu0
    %v394 = vadd.f32 %v269, %v393
    %v395 = vpop.f32.mrb[0].mxu0
    %v396 = vpop.f32.mrb[0].mxu0
    %v397 = vadd.f32 %v269, %v396
    %v398 = vpop.f32.mrb[0].mxu0
    %399 = vmatprep.mubr.bf16.mxu0 0
    %400 = vmatmul.mubr.bf16.gmra.mrb[0].mxu0 %v309
    %v401 = vpop.f32.mrb[0].mxu0
    %v402 = vadd.f32 %v269, %v401
    %v403 = vpop.f32.mrb[0].mxu0
    %v404 = vpop.f32.mrb[0].mxu0
    %v405 = vadd.f32 %v269, %v404
    %v406 = vpop.f32.mrb[0].mxu0
    %407 = vmatprep.mubr.bf16.mxu0 0
    %408 = vmatmul.mubr.bf16.gmra.mrb[0].mxu0 %v310
    %v409 = vpop.f32.mrb[0].mxu0
    %v410 = vadd.f32 %v269, %v409
    %v411 = vpop.f32.mrb[0].mxu0
    %v412 = vpop.f32.mrb[0].mxu0
    %v413 = vadd.f32 %v269, %v412
    %v414 = vpop.f32.mrb[0].mxu0
    %415 = vdwg.mxu0
    %v416 = vmax.f32 %v354, 0.0
    %v417 = vmax.f32 %v357, 0.0
    %v418 = vmax.f32 %v362, 0.0
    %v419 = vmax.f32 %v365, 0.0
    %v420 = vmax.f32 %v370, 0.0
    %v421 = vmax.f32 %v373, 0.0
    %v422 = vmax.f32 %v378, 0.0
    %v423 = vmax.f32 %v381, 0.0
    %v424 = vmax.f32 %v386, 0.0
    %v425 = vmax.f32 %v389, 0.0
    %v426 = vmax.f32 %v394, 0.0
    %v427 = vmax.f32 %v397, 0.0
    %v428 = vmax.f32 %v402, 0.0
    %v429 = vmax.f32 %v405, 0.0
    %v430 = vmax.f32 %v410, 0.0
    %v431 = vmax.f32 %v413, 0.0
    %v432 = vpack.c.bf16 %v417, %v416
    %v433 = vpack.c.bf16 %v419, %v418
    %v434 = vpack.c.bf16 %v421, %v420
    %v435 = vpack.c.bf16 %v423, %v422
    %v436 = vpack.c.bf16 %v425, %v424
    %v437 = vpack.c.bf16 %v427, %v426
    %v438 = vpack.c.bf16 %v429, %v428
    %v439 = vpack.c.bf16 %v431, %v430
    %v440 = vld [vmem:[%s4] sm:$0xf]
    %v441 = vld [vmem:[%s4 + $0x4] sm:$0xf]
    %v442 = vld [vmem:[%s4 + $0x8] sm:$0xf]
    %v443 = vld [vmem:[%s4 + $0xc] sm:$0xf]
    %v448 = vunpack.c.l.b16 %v440
    %v449 = vunpack.c.l.b16 %v441
    %v450 = vunpack.c.l.b16 %v442
    %v451 = vunpack.c.l.b16 %v443
    %v452 = vpack.c.b16 %v449, %v448
    %v453 = vpack.c.b16 %v451, %v450
    %vm456 = vcmask 261120
    %v458 = vsel %vm456, %v432, 0
    %v461 = vsel %vm456, %v433, 0
    %v464 = vsel %vm456, %v434, 0
    %v467 = vsel %vm456, %v435, 0
    %v470 = vsel %vm456, %v436, 0
    %v473 = vsel %vm456, %v437, 0
    %v476 = vsel %vm456, %v438, 0
    %v479 = vsel %vm456, %v439, 0
    %481 = vmatprep.subr.bf16.mxu0 0
    %482 = vmatpush1.bf16.msra.mxu0 %v452
    %483 = vmatprep.subr.bf16.mxu0 0
    %484 = vmatpush1.bf16.msra.mxu0 %v453
    %485 = vmatprep.subr.bf16.mxu0 0
    %486 = vmatpush1.bf16.msra.mxu0 0
    %487 = vmatprep.subr.bf16.mxu0 0
    %488 = vmatpush1.bf16.msra.mxu0 0
    %489 = vmatprep.subr.bf16.mxu0 0
    %490 = vmatpush1.bf16.msra.mxu0 0
    %491 = vmatprep.subr.bf16.mxu0 0
    %492 = vmatpush1.bf16.msra.mxu0 0
    %493 = vmatprep.subr.bf16.mxu0 0
    %494 = vmatpush1.bf16.msra.mxu0 0
    %495 = vmatprep.subr.bf16.mxu0 0
    %496 = vmatpush1.bf16.msra.mxu0 0
    %497 = vmatprep.subr.bf16.mxu0 0
    %498 = vmatpush1.bf16.msra.mxu0 0
    %499 = vmatprep.subr.bf16.mxu0 0
    %500 = vmatpush1.bf16.msra.mxu0 0
    %501 = vmatprep.subr.bf16.mxu0 0
    %502 = vmatpush1.bf16.msra.mxu0 0
    %503 = vmatprep.subr.bf16.mxu0 0
    %504 = vmatpush1.bf16.msra.mxu0 0
    %505 = vmatprep.subr.bf16.mxu0 0
    %506 = vmatpush1.bf16.msra.mxu0 0
    %507 = vmatprep.subr.bf16.mxu0 0
    %508 = vmatpush1.bf16.msra.mxu0 0
    %509 = vmatprep.subr.bf16.mxu0 0
    %510 = vmatpush1.bf16.msra.mxu0 0
    %511 = vmatprep.subr.bf16.mxu0 0
    %512 = vmatpush1.bf16.msra.mxu0 0
    %513 = vmatprep.mubr.bf16.mxu0 0
    %514 = vmatmul.mubr.bf16.gmra.mrb[0].mxu0 %v458
    %v515 = vpop.f32.mrb[0].mxu0
    %v516 = vadd.f32 0.0, %v515
    %v517 = vpop.f32.mrb[0].mxu0
    %v518 = vpop.f32.mrb[0].mxu0
    %v519 = vadd.f32 0.0, %v518
    %v520 = vpop.f32.mrb[0].mxu0
    %521 = vmatprep.mubr.bf16.mxu0 0
    %522 = vmatmul.mubr.bf16.gmra.mrb[0].mxu0 %v461
    %v523 = vpop.f32.mrb[0].mxu0
    %v524 = vadd.f32 0.0, %v523
    %v525 = vpop.f32.mrb[0].mxu0
    %v526 = vpop.f32.mrb[0].mxu0
    %v527 = vadd.f32 0.0, %v526
    %v528 = vpop.f32.mrb[0].mxu0
    %529 = vmatprep.mubr.bf16.mxu0 0
    %530 = vmatmul.mubr.bf16.gmra.mrb[0].mxu0 %v464
    %v531 = vpop.f32.mrb[0].mxu0
    %v532 = vadd.f32 0.0, %v531
    %v533 = vpop.f32.mrb[0].mxu0
    %v534 = vpop.f32.mrb[0].mxu0
    %v535 = vadd.f32 0.0, %v534
    %v536 = vpop.f32.mrb[0].mxu0
    %537 = vmatprep.mubr.bf16.mxu0 0
    %538 = vmatmul.mubr.bf16.gmra.mrb[0].mxu0 %v467
    %v539 = vpop.f32.mrb[0].mxu0
    %v540 = vadd.f32 0.0, %v539
    %v541 = vpop.f32.mrb[0].mxu0
    %v542 = vpop.f32.mrb[0].mxu0
    %v543 = vadd.f32 0.0, %v542
    %v544 = vpop.f32.mrb[0].mxu0
    %545 = vmatprep.mubr.bf16.mxu0 0
    %546 = vmatmul.mubr.bf16.gmra.mrb[0].mxu0 %v470
    %v547 = vpop.f32.mrb[0].mxu0
    %v548 = vadd.f32 0.0, %v547
    %v549 = vpop.f32.mrb[0].mxu0
    %v550 = vpop.f32.mrb[0].mxu0
    %v551 = vadd.f32 0.0, %v550
    %v552 = vpop.f32.mrb[0].mxu0
    %553 = vmatprep.mubr.bf16.mxu0 0
    %554 = vmatmul.mubr.bf16.gmra.mrb[0].mxu0 %v473
    %v555 = vpop.f32.mrb[0].mxu0
    %v556 = vadd.f32 0.0, %v555
    %v557 = vpop.f32.mrb[0].mxu0
    %v558 = vpop.f32.mrb[0].mxu0
    %v559 = vadd.f32 0.0, %v558
    %v560 = vpop.f32.mrb[0].mxu0
    %561 = vmatprep.mubr.bf16.mxu0 0
    %562 = vmatmul.mubr.bf16.gmra.mrb[0].mxu0 %v476
    %v563 = vpop.f32.mrb[0].mxu0
    %v564 = vadd.f32 0.0, %v563
    %v565 = vpop.f32.mrb[0].mxu0
    %v566 = vpop.f32.mrb[0].mxu0
    %v567 = vadd.f32 0.0, %v566
    %v568 = vpop.f32.mrb[0].mxu0
    %569 = vmatprep.mubr.bf16.mxu0 0
    %570 = vmatmul.mubr.bf16.gmra.mrb[0].mxu0 %v479
    %v571 = vpop.f32.mrb[0].mxu0
    %v572 = vadd.f32 0.0, %v571
    %v573 = vpop.f32.mrb[0].mxu0
    %v574 = vpop.f32.mrb[0].mxu0
    %v575 = vadd.f32 0.0, %v574
    %v576 = vpop.f32.mrb[0].mxu0
    %577 = vdwg.mxu0
    %v578 = vpack.c.bf16 %v519, %v516
    %v579 = vpack.c.bf16 %v527, %v524
    %v580 = vpack.c.bf16 %v535, %v532
    %v581 = vpack.c.bf16 %v543, %v540
    %v582 = vpack.c.bf16 %v551, %v548
    %v583 = vpack.c.bf16 %v559, %v556
    %v584 = vpack.c.bf16 %v567, %v564
    %v585 = vpack.c.bf16 %v575, %v572
    %v586 = vld [vmem:[%s5] sm:$0x1]
    %v588 = vlaneseq
    %v589 = vshrl.u32 %v588, 7
    %v590 = vsub.s32 0, %v589
    %v591 = vrot.slane %v586, %v590
    %593 = vmatprep.subr.bf16.mxu0 0
    %594 = vmatpush1.bf16.msra.mxu0 %v578
    %595 = vmatprep.subr.bf16.mxu0 0
    %596 = vmatpush1.bf16.msra.mxu0 %v579
    %597 = vmatprep.subr.bf16.mxu0 0
    %598 = vmatpush1.bf16.msra.mxu0 %v580
    %599 = vmatprep.subr.bf16.mxu0 0
    %600 = vmatpush1.bf16.msra.mxu0 %v581
    %601 = vmatprep.subr.bf16.mxu0 0
    %602 = vmatpush1.bf16.msra.mxu0 %v582
    %603 = vmatprep.subr.bf16.mxu0 0
    %604 = vmatpush1.bf16.msra.mxu0 %v583
    %605 = vmatprep.subr.bf16.mxu0 0
    %606 = vmatpush1.bf16.msra.mxu0 %v584
    %607 = vmatprep.subr.bf16.mxu0 0
    %608 = vmatpush1.bf16.msra.mxu0 %v585
    %609 = vmatprep.subr.bf16.mxu0 0
    %610 = vmatpush1.bf16.msra.mxu0 0
    %611 = vmatprep.subr.bf16.mxu0 0
    %612 = vmatpush1.bf16.msra.mxu0 0
    %613 = vmatprep.subr.bf16.mxu0 0
    %614 = vmatpush1.bf16.msra.mxu0 0
    %615 = vmatprep.subr.bf16.mxu0 0
    %616 = vmatpush1.bf16.msra.mxu0 0
    %617 = vmatprep.subr.bf16.mxu0 0
    %618 = vmatpush1.bf16.msra.mxu0 0
    %619 = vmatprep.subr.bf16.mxu0 0
    %620 = vmatpush1.bf16.msra.mxu0 0
    %621 = vmatprep.subr.bf16.mxu0 0
    %622 = vmatpush1.bf16.msra.mxu0 0
    %623 = vmatprep.subr.bf16.mxu0 0
    %624 = vmatpush1.bf16.msra.mxu0 0
    %625 = vmatprep.mubr.bf16.mxu0 0
    %626 = vmatmul.mubr.bf16.gmra.mrb[0].mxu0 %v303
    %v627 = vpop.f32.mrb[0].mxu0
    %v628 = vadd.f32 %v591, %v627
    %v629 = vpop.f32.mrb[0].mxu0
    %v630 = vpop.f32.mrb[0].mxu0
    %v631 = vadd.f32 %v591, %v630
    %v632 = vpop.f32.mrb[0].mxu0
    %633 = vmatprep.mubr.bf16.mxu0 0
    %634 = vmatmul.mubr.bf16.gmra.mrb[0].mxu0 %v304
    %v635 = vpop.f32.mrb[0].mxu0
    %v636 = vadd.f32 %v591, %v635
    %v637 = vpop.f32.mrb[0].mxu0
    %v638 = vpop.f32.mrb[0].mxu0
    %v639 = vadd.f32 %v591, %v638
    %v640 = vpop.f32.mrb[0].mxu0
    %641 = vmatprep.mubr.bf16.mxu0 0
    %642 = vmatmul.mubr.bf16.gmra.mrb[0].mxu0 %v305
    %v643 = vpop.f32.mrb[0].mxu0
    %v644 = vadd.f32 %v591, %v643
    %v645 = vpop.f32.mrb[0].mxu0
    %v646 = vpop.f32.mrb[0].mxu0
    %v647 = vadd.f32 %v591, %v646
    %v648 = vpop.f32.mrb[0].mxu0
    %649 = vmatprep.mubr.bf16.mxu0 0
    %650 = vmatmul.mubr.bf16.gmra.mrb[0].mxu0 %v306
    %v651 = vpop.f32.mrb[0].mxu0
    %v652 = vadd.f32 %v591, %v651
    %v653 = vpop.f32.mrb[0].mxu0
    %v654 = vpop.f32.mrb[0].mxu0
    %v655 = vadd.f32 %v591, %v654
    %v656 = vpop.f32.mrb[0].mxu0
    %657 = vmatprep.mubr.bf16.mxu0 0
    %658 = vmatmul.mubr.bf16.gmra.mrb[0].mxu0 %v307
    %v659 = vpop.f32.mrb[0].mxu0
    %v660 = vadd.f32 %v591, %v659
    %v661 = vpop.f32.mrb[0].mxu0
    %v662 = vpop.f32.mrb[0].mxu0
    %v663 = vadd.f32 %v591, %v662
    %v664 = vpop.f32.mrb[0].mxu0
    %665 = vmatprep.mubr.bf16.mxu0 0
    %666 = vmatmul.mubr.bf16.gmra.mrb[0].mxu0 %v308
    %v667 = vpop.f32.mrb[0].mxu0
    %v668 = vadd.f32 %v591, %v667
    %v669 = vpop.f32.mrb[0].mxu0
    %v670 = vpop.f32.mrb[0].mxu0
    %v671 = vadd.f32 %v591, %v670
    %v672 = vpop.f32.mrb[0].mxu0
    %673 = vmatprep.mubr.bf16.mxu0 0
    %674 = vmatmul.mubr.bf16.gmra.mrb[0].mxu0 %v309
    %v675 = vpop.f32.mrb[0].mxu0
    %v676 = vadd.f32 %v591, %v675
    %v677 = vpop.f32.mrb[0].mxu0
    %v678 = vpop.f32.mrb[0].mxu0
    %v679 = vadd.f32 %v591, %v678
    %v680 = vpop.f32.mrb[0].mxu0
    %681 = vmatprep.mubr.bf16.mxu0 0
    %682 = vmatmul.mubr.bf16.gmra.mrb[0].mxu0 %v310
    %v683 = vpop.f32.mrb[0].mxu0
    %v684 = vadd.f32 %v591, %v683
    %v685 = vpop.f32.mrb[0].mxu0
    %v686 = vpop.f32.mrb[0].mxu0
    %v687 = vadd.f32 %v591, %v686
    %v688 = vpop.f32.mrb[0].mxu0
    %689 = vdwg.mxu0
    %v690 = vmax.f32 %v628, 0.0
    %v691 = vmax.f32 %v631, 0.0
    %v692 = vmax.f32 %v636, 0.0
    %v693 = vmax.f32 %v639, 0.0
    %v694 = vmax.f32 %v644, 0.0
    %v695 = vmax.f32 %v647, 0.0
    %v696 = vmax.f32 %v652, 0.0
    %v697 = vmax.f32 %v655, 0.0
    %v698 = vmax.f32 %v660, 0.0
    %v699 = vmax.f32 %v663, 0.0
    %v700 = vmax.f32 %v668, 0.0
    %v701 = vmax.f32 %v671, 0.0
    %v702 = vmax.f32 %v676, 0.0
    %v703 = vmax.f32 %v679, 0.0
    %v704 = vmax.f32 %v684, 0.0
    %v705 = vmax.f32 %v687, 0.0
    %v706 = vpack.c.bf16 %v691, %v690
    %v707 = vpack.c.bf16 %v693, %v692
    %v708 = vpack.c.bf16 %v695, %v694
    %v709 = vpack.c.bf16 %v697, %v696
    %v710 = vpack.c.bf16 %v699, %v698
    %v711 = vpack.c.bf16 %v701, %v700
    %v712 = vpack.c.bf16 %v703, %v702
    %v713 = vpack.c.bf16 %v705, %v704
    %v714 = vld [vmem:[#allocation5] sm:$0xf]
    %v715 = vld [vmem:[#allocation5 + $0x4] sm:$0xf]
    %v716 = vld [vmem:[#allocation5 + $0x8] sm:$0xf]
    %v717 = vld [vmem:[#allocation5 + $0xc] sm:$0xf]
    %v718 = vld [vmem:[%s7] sm:$0x1]
    %v720 = vlaneseq
    %v721 = vshrl.u32 %v720, 7
    %v722 = vsub.s32 0, %v721
    %v723 = vrot.slane %v718, %v722
    %v729 = vunpack.c.l.b16 %v714
    %v730 = vunpack.c.l.b16 %v715
    %v731 = vunpack.c.l.b16 %v716
    %v732 = vunpack.c.l.b16 %v717
    %v733 = vpack.c.b16 %v730, %v729
    %v734 = vpack.c.b16 %v732, %v731
    %v738 = vsel %vm456, %v706, 0
    %v741 = vsel %vm456, %v707, 0
    %v744 = vsel %vm456, %v708, 0
    %v747 = vsel %vm456, %v709, 0
    %v750 = vsel %vm456, %v710, 0
    %v753 = vsel %vm456, %v711, 0
    %v756 = vsel %vm456, %v712, 0
    %v759 = vsel %vm456, %v713, 0
    %761 = vmatprep.subr.bf16.mxu0 0
    %762 = vmatpush1.bf16.msra.mxu0 %v733
    %763 = vmatprep.subr.bf16.mxu0 0
    %764 = vmatpush1.bf16.msra.mxu0 %v734
    %765 = vmatprep.subr.bf16.mxu0 0
    %766 = vmatpush1.bf16.msra.mxu0 0
    %767 = vmatprep.subr.bf16.mxu0 0
    %768 = vmatpush1.bf16.msra.mxu0 0
    %769 = vmatprep.subr.bf16.mxu0 0
    %770 = vmatpush1.bf16.msra.mxu0 0
    %771 = vmatprep.subr.bf16.mxu0 0
    %772 = vmatpush1.bf16.msra.mxu0 0
    %773 = vmatprep.subr.bf16.mxu0 0
    %774 = vmatpush1.bf16.msra.mxu0 0
    %775 = vmatprep.subr.bf16.mxu0 0
    %776 = vmatpush1.bf16.msra.mxu0 0
    %777 = vmatprep.subr.bf16.mxu0 0
    %778 = vmatpush1.bf16.msra.mxu0 0
    %779 = vmatprep.subr.bf16.mxu0 0
    %780 = vmatpush1.bf16.msra.mxu0 0
    %781 = vmatprep.subr.bf16.mxu0 0
    %782 = vmatpush1.bf16.msra.mxu0 0
    %783 = vmatprep.subr.bf16.mxu0 0
    %784 = vmatpush1.bf16.msra.mxu0 0
    %785 = vmatprep.subr.bf16.mxu0 0
    %786 = vmatpush1.bf16.msra.mxu0 0
    %787 = vmatprep.subr.bf16.mxu0 0
    %788 = vmatpush1.bf16.msra.mxu0 0
    %789 = vmatprep.subr.bf16.mxu0 0
    %790 = vmatpush1.bf16.msra.mxu0 0
    %791 = vmatprep.subr.bf16.mxu0 0
    %792 = vmatpush1.bf16.msra.mxu0 0
    %793 = vmatprep.mubr.bf16.mxu0 0
    %794 = vmatmul.mubr.bf16.gmra.mrb[0].mxu0 %v738
    %v795 = vpop.f32.mrb[0].mxu0
    %v796 = vadd.f32 %v723, %v795
    %v797 = vpop.f32.mrb[0].mxu0
    %v798 = vpop.f32.mrb[0].mxu0
    %v799 = vadd.f32 %v723, %v798
    %v800 = vpop.f32.mrb[0].mxu0
    %801 = vmatprep.mubr.bf16.mxu0 0
    %802 = vmatmul.mubr.bf16.gmra.mrb[0].mxu0 %v741
    %v803 = vpop.f32.mrb[0].mxu0
    %v804 = vadd.f32 %v723, %v803
    %v805 = vpop.f32.mrb[0].mxu0
    %v806 = vpop.f32.mrb[0].mxu0
    %v807 = vadd.f32 %v723, %v806
    %v808 = vpop.f32.mrb[0].mxu0
    %809 = vmatprep.mubr.bf16.mxu0 0
    %810 = vmatmul.mubr.bf16.gmra.mrb[0].mxu0 %v744
    %v811 = vpop.f32.mrb[0].mxu0
    %v812 = vadd.f32 %v723, %v811
    %v813 = vpop.f32.mrb[0].mxu0
    %v814 = vpop.f32.mrb[0].mxu0
    %v815 = vadd.f32 %v723, %v814
    %v816 = vpop.f32.mrb[0].mxu0
    %817 = vmatprep.mubr.bf16.mxu0 0
    %818 = vmatmul.mubr.bf16.gmra.mrb[0].mxu0 %v747
    %v819 = vpop.f32.mrb[0].mxu0
    %v820 = vadd.f32 %v723, %v819
    %v821 = vpop.f32.mrb[0].mxu0
    %v822 = vpop.f32.mrb[0].mxu0
    %v823 = vadd.f32 %v723, %v822
    %v824 = vpop.f32.mrb[0].mxu0
    %825 = vmatprep.mubr.bf16.mxu0 0
    %826 = vmatmul.mubr.bf16.gmra.mrb[0].mxu0 %v750
    %v827 = vpop.f32.mrb[0].mxu0
    %v828 = vadd.f32 %v723, %v827
    %v829 = vpop.f32.mrb[0].mxu0
    %v830 = vpop.f32.mrb[0].mxu0
    %v831 = vadd.f32 %v723, %v830
    %v832 = vpop.f32.mrb[0].mxu0
    %833 = vmatprep.mubr.bf16.mxu0 0
    %834 = vmatmul.mubr.bf16.gmra.mrb[0].mxu0 %v753
    %v835 = vpop.f32.mrb[0].mxu0
    %v836 = vadd.f32 %v723, %v835
    %v837 = vpop.f32.mrb[0].mxu0
    %v838 = vpop.f32.mrb[0].mxu0
    %v839 = vadd.f32 %v723, %v838
    %v840 = vpop.f32.mrb[0].mxu0
    %841 = vmatprep.mubr.bf16.mxu0 0
    %842 = vmatmul.mubr.bf16.gmra.mrb[0].mxu0 %v756
    %v843 = vpop.f32.mrb[0].mxu0
    %v844 = vadd.f32 %v723, %v843
    %v845 = vpop.f32.mrb[0].mxu0
    %v846 = vpop.f32.mrb[0].mxu0
    %v847 = vadd.f32 %v723, %v846
    %v848 = vpop.f32.mrb[0].mxu0
    %849 = vmatprep.mubr.bf16.mxu0 0
    %850 = vmatmul.mubr.bf16.gmra.mrb[0].mxu0 %v759
    %v851 = vpop.f32.mrb[0].mxu0
    %v852 = vadd.f32 %v723, %v851
    %v853 = vpop.f32.mrb[0].mxu0
    %v854 = vpop.f32.mrb[0].mxu0
    %v855 = vadd.f32 %v723, %v854
    %v856 = vpop.f32.mrb[0].mxu0
    %857 = vdwg.mxu0
    %858 = vmax.xlane.f32.xlu0 %v796
    %v859 = vpop.xlane.xlu0 %858
    %860 = vmax.xlane.f32.xlu0 %v799
    %v861 = vpop.xlane.xlu0 %860
    %862 = vmax.xlane.f32.xlu0 %v804
    %v863 = vpop.xlane.xlu0 %862
    %864 = vmax.xlane.f32.xlu0 %v807
    %v865 = vpop.xlane.xlu0 %864
    %866 = vmax.xlane.f32.xlu0 %v812
    %v867 = vpop.xlane.xlu0 %866
    %868 = vmax.xlane.f32.xlu0 %v815
    %v869 = vpop.xlane.xlu0 %868
    %870 = vmax.xlane.f32.xlu0 %v820
    %v871 = vpop.xlane.xlu0 %870
    %872 = vmax.xlane.f32.xlu0 %v823
    %v873 = vpop.xlane.xlu0 %872
    %874 = vmax.xlane.f32.xlu0 %v828
    %v875 = vpop.xlane.xlu0 %874
    %876 = vmax.xlane.f32.xlu0 %v831
    %v877 = vpop.xlane.xlu0 %876
    %878 = vmax.xlane.f32.xlu0 %v836
    %v879 = vpop.xlane.xlu0 %878
    %880 = vmax.xlane.f32.xlu0 %v839
    %v881 = vpop.xlane.xlu0 %880
    %882 = vmax.xlane.f32.xlu0 %v844
    %v883 = vpop.xlane.xlu0 %882
    %884 = vmax.xlane.f32.xlu0 %v847
    %v885 = vpop.xlane.xlu0 %884
    %886 = vmax.xlane.f32.xlu0 %v852
    %v887 = vpop.xlane.xlu0 %886
    %888 = vmax.xlane.f32.xlu0 %v855
    %v889 = vpop.xlane.xlu0 %888
    %v890 = vsub.f32 %v796, %v859
    %v891 = vsub.f32 %v799, %v861
    %v892 = vsub.f32 %v804, %v863
    %v893 = vsub.f32 %v807, %v865
    %v894 = vsub.f32 %v812, %v867
    %v895 = vsub.f32 %v815, %v869
    %v896 = vsub.f32 %v820, %v871
    %v897 = vsub.f32 %v823, %v873
    %v898 = vsub.f32 %v828, %v875
    %v899 = vsub.f32 %v831, %v877
    %v900 = vsub.f32 %v836, %v879
    %v901 = vsub.f32 %v839, %v881
    %v902 = vsub.f32 %v844, %v883
    %v903 = vsub.f32 %v847, %v885
    %v904 = vsub.f32 %v852, %v887
    %v905 = vsub.f32 %v855, %v889
    %v906 = vmul.f32 %v890, 1.442695
    %v907 = vpow.pop %v906
    %v908 = vmul.f32 %v891, 1.442695
    %v909 = vpow.pop %v908
    %v910 = vmul.f32 %v892, 1.442695
    %v911 = vpow.pop %v910
    %v912 = vmul.f32 %v893, 1.442695
    %v913 = vpow.pop %v912
    %v914 = vmul.f32 %v894, 1.442695
    %v915 = vpow.pop %v914
    %v916 = vmul.f32 %v895, 1.442695
    %v917 = vpow.pop %v916
    %v918 = vmul.f32 %v896, 1.442695
    %v919 = vpow.pop %v918
    %v920 = vmul.f32 %v897, 1.442695
    %v921 = vpow.pop %v920
    %v922 = vmul.f32 %v898, 1.442695
    %v923 = vpow.pop %v922
    %v924 = vmul.f32 %v899, 1.442695
    %v925 = vpow.pop %v924
    %v926 = vmul.f32 %v900, 1.442695
    %v927 = vpow.pop %v926
    %v928 = vmul.f32 %v901, 1.442695
    %v929 = vpow.pop %v928
    %v930 = vmul.f32 %v902, 1.442695
    %v931 = vpow.pop %v930
    %v932 = vmul.f32 %v903, 1.442695
    %v933 = vpow.pop %v932
    %v934 = vmul.f32 %v904, 1.442695
    %v935 = vpow.pop %v934
    %v936 = vmul.f32 %v905, 1.442695
    %v937 = vpow.pop %v936
    %938 = vadd.xlane.f32.xlu0 %v907
    %v939 = vpop.xlane.xlu0 %938
    %940 = vadd.xlane.f32.xlu0 %v909
    %v941 = vpop.xlane.xlu0 %940
    %942 = vadd.xlane.f32.xlu0 %v911
    %v943 = vpop.xlane.xlu0 %942
    %944 = vadd.xlane.f32.xlu0 %v913
    %v945 = vpop.xlane.xlu0 %944
    %946 = vadd.xlane.f32.xlu0 %v915
    %v947 = vpop.xlane.xlu0 %946
    %948 = vadd.xlane.f32.xlu0 %v917
    %v949 = vpop.xlane.xlu0 %948
    %950 = vadd.xlane.f32.xlu0 %v919
    %v951 = vpop.xlane.xlu0 %950
    %952 = vadd.xlane.f32.xlu0 %v921
    %v953 = vpop.xlane.xlu0 %952
    %954 = vadd.xlane.f32.xlu0 %v923
    %v955 = vpop.xlane.xlu0 %954
    %956 = vadd.xlane.f32.xlu0 %v925
    %v957 = vpop.xlane.xlu0 %956
    %958 = vadd.xlane.f32.xlu0 %v927
    %v959 = vpop.xlane.xlu0 %958
    %960 = vadd.xlane.f32.xlu0 %v929
    %v961 = vpop.xlane.xlu0 %960
    %962 = vadd.xlane.f32.xlu0 %v931
    %v963 = vpop.xlane.xlu0 %962
    %964 = vadd.xlane.f32.xlu0 %v933
    %v965 = vpop.xlane.xlu0 %964
    %966 = vadd.xlane.f32.xlu0 %v935
    %v967 = vpop.xlane.xlu0 %966
    %968 = vadd.xlane.f32.xlu0 %v937
    %v969 = vpop.xlane.xlu0 %968
    %v970 = vrcp.pop %v939
    %v971 = vrcp.pop %v941
    %v972 = vrcp.pop %v943
    %v973 = vrcp.pop %v945
    %v974 = vrcp.pop %v947
    %v975 = vrcp.pop %v949
    %v976 = vrcp.pop %v951
    %v977 = vrcp.pop %v953
    %v978 = vrcp.pop %v955
    %v979 = vrcp.pop %v957
    %v980 = vrcp.pop %v959
    %v981 = vrcp.pop %v961
    %v982 = vrcp.pop %v963
    %v983 = vrcp.pop %v965
    %v984 = vrcp.pop %v967
    %v985 = vrcp.pop %v969
    %v986 = vmul.f32 %v907, %v970
    %v987 = vmul.f32 %v909, %v971
    %v988 = vmul.f32 %v911, %v972
    %v989 = vmul.f32 %v913, %v973
    %v990 = vmul.f32 %v915, %v974
    %v991 = vmul.f32 %v917, %v975
    %v992 = vmul.f32 %v919, %v976
    %v993 = vmul.f32 %v921, %v977
    %v994 = vmul.f32 %v923, %v978
    %v995 = vmul.f32 %v925, %v979
    %v996 = vmul.f32 %v927, %v980
    %v997 = vmul.f32 %v929, %v981
    %v998 = vmul.f32 %v931, %v982
    %v999 = vmul.f32 %v933, %v983
    %v1000 = vmul.f32 %v935, %v984
    %v1001 = vmul.f32 %v937, %v985
    %1002 = vst [vmem:[#allocation7] sm:$0xff] %v986
    %1003 = vst [vmem:[#allocation7 + $0x8] sm:$0xff] %v987
    %1004 = vst [vmem:[#allocation7 + $0x10] sm:$0xff] %v988
    %1005 = vst [vmem:[#allocation7 + $0x18] sm:$0xff] %v989
    %1006 = vst [vmem:[#allocation7 + $0x20] sm:$0xff] %v990
    %1007 = vst [vmem:[#allocation7 + $0x28] sm:$0xff] %v991
    %1008 = vst [vmem:[#allocation7 + $0x30] sm:$0xff] %v992
    %1009 = vst [vmem:[#allocation7 + $0x38] sm:$0xff] %v993
    %1010 = vst [vmem:[#allocation7 + $0x40] sm:$0xff] %v994
    %1011 = vst [vmem:[#allocation7 + $0x48] sm:$0xff] %v995
    %1012 = vst [vmem:[#allocation7 + $0x50] sm:$0xff] %v996
    %1013 = vst [vmem:[#allocation7 + $0x58] sm:$0xff] %v997
    %1014 = vst [vmem:[#allocation7 + $0x60] sm:$0xff] %v998
    %1015 = vst [vmem:[#allocation7 + $0x68] sm:$0xff] %v999
    %1016 = vst [vmem:[#allocation7 + $0x70] sm:$0xff] %v1000
    %1017 = vst [vmem:[#allocation7 + $0x78] sm:$0xff] %v1001
    // Predicated region
    $region42: #{tpu_custom_call.1} parent=1 // pred_check
      _
    $region43: #{tpu_custom_call.1} parent=1 // pred_check_branch
      %1019 = sbr.rel (0) target = $region45
    $region44: #{tpu_custom_call.1} parent=1 // pred_region
      %s1021 = ssub.s32 2048, 2048
      %1022 = vsyncadd [#allocation4], %s1021
      %s1023 = sshll.u32 [#allocation7], 4
      %s1024 = int_to_ptr.vmem [resolvable:$true] %s1023
      %1029 = dma.vmem_to_hbm [thread:$0]  %s1024, 2048, %s8, [#allocation4], 128, 128, 8
    $region45: #{tpu_custom_call.1} parent=1 // pred_fallthru
      _
    // Predicated region
    $region46: #{tpu_custom_call.1} parent=1 // pred_check
      _
    $region47: #{tpu_custom_call.1} parent=1 // pred_check_branch
      %1031 = sbr.rel (0) target = $region49
    $region48: #{tpu_custom_call.1} parent=1 // pred_region
      %1032 = dma.done [#allocation4], 2048
    $region49: #{tpu_custom_call.1} parent=1 // pred_fallthru
      _
    %1033 = vsyncpa [#allocation3], 1
    %1034 = vsyncpa [#allocation6], 1
    %1035 = vsyncpa [#allocation4], 1

</llo_original>
